<compile_context>
chip_gen: v6e
topology: v6e:2x2x1
jax: 0.10.0
libtpu: 0.0.40
codegen_flags: <defaults>
</compile_context>

<pallas_src>
import jax
import jax.numpy as jnp
from jax.experimental import pallas as pl
from jax.experimental.pallas import tpu as pltpu

B, C_IN, H, W = 2, 4, 16, 16
S = H * W                      # 256 — lane axis inside the kernel
HIDDEN = 32
NUM_CLASSES = 8
LANES = 128                    # lane-dense width of output / param slab
OUT_ROWS = 8                   # sublane-padded output rows (>= B)
PARAM_ROWS = 40                # sublane-padded param rows (>= HIDDEN + 1)

# Packed-parameter slab layout ([PARAM_ROWS, LANES], f32):
#   rows 0..HIDDEN-1, lanes 0..NUM_CLASSES-1  : w2    [HIDDEN, NUM_CLASSES]
#   row  HIDDEN,      lanes 0..NUM_CLASSES-1  : b2    [NUM_CLASSES]
#   rows 0..HIDDEN-1, lanes W1_LANE0..+C_IN-1 : w1^T  [HIDDEN, C_IN]
#   rows 0..HIDDEN-1, lane  B1_LANE           : b1    [HIDDEN]
W1_LANE0 = NUM_CLASSES          # 8
B1_LANE = NUM_CLASSES + C_IN    # 12


def classifier_kernel(x_ref, p_ref, out_ref):
    # x_ref  : [B*C_IN, S]          free contiguous view of NCHW input
    # p_ref  : [PARAM_ROWS, LANES]  packed parameter slab (layout above)
    # out_ref: [OUT_ROWS, LANES]    lane/sublane-dense logits slab
    p = p_ref[...]
    w1t = p[0:HIDDEN, W1_LANE0:W1_LANE0 + C_IN]    # [HIDDEN, C_IN], column-sliceable
    b1c = p[0:HIDDEN, B1_LANE:B1_LANE + 1]         # [HIDDEN, 1]
    w2p = p[0:HIDDEN, :]                           # [HIDDEN, LANES] (lanes >= 8 junk, sliced off by wrapper)
    b2p = p[HIDDEN:HIDDEN + 1, :]                  # [1, LANES]

    rows = []
    for b in range(B):                             # static unroll, B = 2
        r0 = b * C_IN
        # backbone: 1x1 conv as a K=4 VPU FMA chain (MXU deliberately skipped).
        acc = b1c + x_ref[r0:r0 + 1, :] * w1t[:, 0:1]              # [HIDDEN, S]
        for c in range(1, C_IN):
            acc = acc + x_ref[r0 + c:r0 + c + 1, :] * w1t[:, c:c + 1]
        h = jnp.maximum(acc, 0.0)                                  # ReLU
        # backbone: global average pool over spatial positions (lane reduce).
        feat = jnp.mean(h, axis=-1, keepdims=True)                 # [HIDDEN, 1]
        # head (label is None path): VPU broadcast-mul + sublane reduce,
        # equals feat @ w2 + b2 in the first NUM_CLASSES lanes.
        logit = jnp.sum(feat * w2p, axis=0, keepdims=True) + b2p   # [1, LANES]
        rows.append(logit)
    rows.append(jnp.zeros((OUT_ROWS - B, LANES), jnp.float32))
    out_ref[...] = jnp.concatenate(rows, axis=0)   # single full (8,128) store


def pack_params(params):
    """One-time (init-time) packing of (w1, b1, w2, b2) into one VMEM slab."""
    w1, b1, w2, b2 = params
    slab = jnp.zeros((PARAM_ROWS, LANES), jnp.float32)
    slab = slab.at[:HIDDEN, :NUM_CLASSES].set(w2)
    slab = slab.at[HIDDEN, :NUM_CLASSES].set(jnp.reshape(b2, (-1,)))
    slab = slab.at[:HIDDEN, W1_LANE0:W1_LANE0 + C_IN].set(jnp.transpose(w1))
    slab = slab.at[:HIDDEN, B1_LANE].set(jnp.reshape(b1, (-1,)))
    return slab


def classifier_model(x_nchw, param_slab, label=None):
    """Forward pass of ClassifierModel.

    x_nchw: [B, C_IN, H, W] float32 (NCHW, PyTorch convention).
    param_slab: pre-packed [PARAM_ROWS, LANES] parameter slab (pack_params).
    Returns logits [B, NUM_CLASSES] if label is None, else scalar CE loss.
    """
    b, c, h, w = x_nchw.shape
    s = h * w
    # Free contiguous view (no transpose, no copy): NCHW -> [B*C, S].
    x2 = x_nchw.reshape(b * c, s)

    out = pl.pallas_call(
        classifier_kernel,
        out_shape=jax.ShapeDtypeStruct((OUT_ROWS, LANES), jnp.float32),
        in_specs=[
            pl.BlockSpec(memory_space=pltpu.MemorySpace.VMEM),
            pl.BlockSpec(memory_space=pltpu.MemorySpace.VMEM),
        ],
        out_specs=pl.BlockSpec(memory_space=pltpu.MemorySpace.VMEM),
    )(x2, param_slab)

    # Keep this slice BEFORE any softmax: padded lanes/rows are junk/zero.
    logits = out[:b, :NUM_CLASSES]
    if label is None:
        return logits
    # head(x, label) branch: cross-entropy loss (tiny [B, K] softmax, XLA glue).
    # TODO(synk): fold CE into the kernel (labels via SMEM scalar prefetch)
    # only if the loss path becomes the hot path.
    logz = jax.nn.log_softmax(logits, axis=-1)
    return -jnp.mean(jnp.take_along_axis(logz, label[:, None], axis=-1))


def init_params(key):
    k1, k2, k3, k4 = jax.random.split(key, 4)
    w1 = jax.random.normal(k1, (C_IN, HIDDEN), jnp.float32) * 0.1
    b1 = jax.random.normal(k2, (1, HIDDEN), jnp.float32) * 0.01
    w2 = jax.random.normal(k3, (HIDDEN, NUM_CLASSES), jnp.float32) * 0.1
    b2 = jax.random.normal(k4, (1, NUM_CLASSES), jnp.float32) * 0.01
    return w1, b1, w2, b2


if __name__ == "__main__":
    key = jax.random.PRNGKey(0)
    kx, kp, kl = jax.random.split(key, 3)
    x = jax.random.normal(kx, (B, C_IN, H, W), jnp.float32)   # NCHW
    params = init_params(kp)
    # Init-time packing: no per-call parameter-prep HLOs on the forward path.
    param_slab = jax.block_until_ready(pack_params(params))
    label = jax.random.randint(kl, (B,), 0, NUM_CLASSES)

    fwd = jax.jit(classifier_model)

    logits = fwd(x, param_slab)            # label is None path
    loss = fwd(x, param_slab, label)       # label path
    jax.block_until_ready(logits)
    jax.block_until_ready(loss)

    assert logits.shape == (B, NUM_CLASSES)
    assert loss.shape == ()
    print("KERNEL_OK")
</pallas_src>

<mosaic_0001>
module attributes {stable_mosaic.version = 11 : i64} {
  func.func @classifier_kernel(%arg0: memref<8x256xf32, #tpu.memory_space<vmem>>, %arg1: memref<40x128xf32, #tpu.memory_space<vmem>>, %arg2: memref<8x128xf32, #tpu.memory_space<vmem>>) attributes {dimension_semantics = [], scalar_prefetch = 0 : i64, scratch_operands = 0 : i64, tpu.core_type = #tpu.core_type<tc>} {
    %c0 = arith.constant 0 : index
    %c0_0 = arith.constant 0 : index
    %0 = vector.load %arg1[%c0, %c0_0] : memref<40x128xf32, #tpu.memory_space<vmem>>, vector<40x128xf32>
    %1 = vector.extract_strided_slice %0 {offsets = [0, 8], sizes = [32, 4], strides = [1, 1]} : vector<40x128xf32> to vector<32x4xf32>
    %2 = vector.extract_strided_slice %0 {offsets = [0, 12], sizes = [32, 1], strides = [1, 1]} : vector<40x128xf32> to vector<32x1xf32>
    %3 = vector.extract_strided_slice %0 {offsets = [0, 0], sizes = [32, 128], strides = [1, 1]} : vector<40x128xf32> to vector<32x128xf32>
    %4 = vector.extract_strided_slice %0 {offsets = [32, 0], sizes = [1, 128], strides = [1, 1]} : vector<40x128xf32> to vector<1x128xf32>
    %c0_1 = arith.constant 0 : index
    %c0_2 = arith.constant 0 : index
    %5 = vector.load %arg0[%c0_1, %c0_2] : memref<8x256xf32, #tpu.memory_space<vmem>>, vector<1x256xf32>
    %6 = vector.extract_strided_slice %1 {offsets = [0, 0], sizes = [32, 1], strides = [1, 1]} : vector<32x4xf32> to vector<32x1xf32>
    %7 = vector.broadcast %5 : vector<1x256xf32> to vector<32x256xf32>
    %8 = vector.broadcast %6 : vector<32x1xf32> to vector<32x256xf32>
    %9 = arith.mulf %7, %8 : vector<32x256xf32>
    %10 = vector.broadcast %2 : vector<32x1xf32> to vector<32x256xf32>
    %11 = arith.addf %10, %9 : vector<32x256xf32>
    %c1 = arith.constant 1 : index
    %c0_3 = arith.constant 0 : index
    %12 = vector.load %arg0[%c1, %c0_3] : memref<8x256xf32, #tpu.memory_space<vmem>>, vector<1x256xf32>
    %13 = vector.extract_strided_slice %1 {offsets = [0, 1], sizes = [32, 1], strides = [1, 1]} : vector<32x4xf32> to vector<32x1xf32>
    %14 = vector.broadcast %12 : vector<1x256xf32> to vector<32x256xf32>
    %15 = vector.broadcast %13 : vector<32x1xf32> to vector<32x256xf32>
    %16 = arith.mulf %14, %15 : vector<32x256xf32>
    %17 = arith.addf %11, %16 : vector<32x256xf32>
    %c2 = arith.constant 2 : index
    %c0_4 = arith.constant 0 : index
    %18 = vector.load %arg0[%c2, %c0_4] : memref<8x256xf32, #tpu.memory_space<vmem>>, vector<1x256xf32>
    %19 = vector.extract_strided_slice %1 {offsets = [0, 2], sizes = [32, 1], strides = [1, 1]} : vector<32x4xf32> to vector<32x1xf32>
    %20 = vector.broadcast %18 : vector<1x256xf32> to vector<32x256xf32>
    %21 = vector.broadcast %19 : vector<32x1xf32> to vector<32x256xf32>
    %22 = arith.mulf %20, %21 : vector<32x256xf32>
    %23 = arith.addf %17, %22 : vector<32x256xf32>
    %c3 = arith.constant 3 : index
    %c0_5 = arith.constant 0 : index
    %24 = vector.load %arg0[%c3, %c0_5] : memref<8x256xf32, #tpu.memory_space<vmem>>, vector<1x256xf32>
    %25 = vector.extract_strided_slice %1 {offsets = [0, 3], sizes = [32, 1], strides = [1, 1]} : vector<32x4xf32> to vector<32x1xf32>
    %26 = vector.broadcast %24 : vector<1x256xf32> to vector<32x256xf32>
    %27 = vector.broadcast %25 : vector<32x1xf32> to vector<32x256xf32>
    %28 = arith.mulf %26, %27 : vector<32x256xf32>
    %29 = arith.addf %23, %28 : vector<32x256xf32>
    %cst = arith.constant 0.000000e+00 : f32
    %30 = vector.broadcast %cst : f32 to vector<32x256xf32>
    %31 = arith.maximumf %29, %30 : vector<32x256xf32>
    %cst_6 = arith.constant dense<0.000000e+00> : vector<32xf32>
    %32 = vector.multi_reduction <add>, %31, %cst_6 [1] : vector<32x256xf32> to vector<32xf32>
    %33 = vector.shape_cast %32 : vector<32xf32> to vector<32x1xf32>
    %cst_7 = arith.constant 2.560000e+02 : f32
    %34 = vector.broadcast %cst_7 : f32 to vector<32x1xf32>
    %35 = arith.divf %33, %34 : vector<32x1xf32>
    %36 = vector.broadcast %35 : vector<32x1xf32> to vector<32x128xf32>
    %37 = arith.mulf %36, %3 : vector<32x128xf32>
    %cst_8 = arith.constant dense<0.000000e+00> : vector<128xf32>
    %38 = vector.multi_reduction <add>, %37, %cst_8 [0] : vector<32x128xf32> to vector<128xf32>
    %39 = vector.shape_cast %38 : vector<128xf32> to vector<1x128xf32>
    %40 = arith.addf %39, %4 : vector<1x128xf32>
    %c4 = arith.constant 4 : index
    %c0_9 = arith.constant 0 : index
    %41 = vector.load %arg0[%c4, %c0_9] : memref<8x256xf32, #tpu.memory_space<vmem>>, vector<1x256xf32>
    %42 = vector.extract_strided_slice %1 {offsets = [0, 0], sizes = [32, 1], strides = [1, 1]} : vector<32x4xf32> to vector<32x1xf32>
    %43 = vector.broadcast %41 : vector<1x256xf32> to vector<32x256xf32>
    %44 = vector.broadcast %42 : vector<32x1xf32> to vector<32x256xf32>
    %45 = arith.mulf %43, %44 : vector<32x256xf32>
    %46 = vector.broadcast %2 : vector<32x1xf32> to vector<32x256xf32>
    %47 = arith.addf %46, %45 : vector<32x256xf32>
    %c5 = arith.constant 5 : index
    %c0_10 = arith.constant 0 : index
    %48 = vector.load %arg0[%c5, %c0_10] : memref<8x256xf32, #tpu.memory_space<vmem>>, vector<1x256xf32>
    %49 = vector.extract_strided_slice %1 {offsets = [0, 1], sizes = [32, 1], strides = [1, 1]} : vector<32x4xf32> to vector<32x1xf32>
    %50 = vector.broadcast %48 : vector<1x256xf32> to vector<32x256xf32>
    %51 = vector.broadcast %49 : vector<32x1xf32> to vector<32x256xf32>
    %52 = arith.mulf %50, %51 : vector<32x256xf32>
    %53 = arith.addf %47, %52 : vector<32x256xf32>
    %c6 = arith.constant 6 : index
    %c0_11 = arith.constant 0 : index
    %54 = vector.load %arg0[%c6, %c0_11] : memref<8x256xf32, #tpu.memory_space<vmem>>, vector<1x256xf32>
    %55 = vector.extract_strided_slice %1 {offsets = [0, 2], sizes = [32, 1], strides = [1, 1]} : vector<32x4xf32> to vector<32x1xf32>
    %56 = vector.broadcast %54 : vector<1x256xf32> to vector<32x256xf32>
    %57 = vector.broadcast %55 : vector<32x1xf32> to vector<32x256xf32>
    %58 = arith.mulf %56, %57 : vector<32x256xf32>
    %59 = arith.addf %53, %58 : vector<32x256xf32>
    %c7 = arith.constant 7 : index
    %c0_12 = arith.constant 0 : index
    %60 = vector.load %arg0[%c7, %c0_12] : memref<8x256xf32, #tpu.memory_space<vmem>>, vector<1x256xf32>
    %61 = vector.extract_strided_slice %1 {offsets = [0, 3], sizes = [32, 1], strides = [1, 1]} : vector<32x4xf32> to vector<32x1xf32>
    %62 = vector.broadcast %60 : vector<1x256xf32> to vector<32x256xf32>
    %63 = vector.broadcast %61 : vector<32x1xf32> to vector<32x256xf32>
    %64 = arith.mulf %62, %63 : vector<32x256xf32>
    %65 = arith.addf %59, %64 : vector<32x256xf32>
    %cst_13 = arith.constant 0.000000e+00 : f32
    %66 = vector.broadcast %cst_13 : f32 to vector<32x256xf32>
    %67 = arith.maximumf %65, %66 : vector<32x256xf32>
    %cst_14 = arith.constant dense<0.000000e+00> : vector<32xf32>
    %68 = vector.multi_reduction <add>, %67, %cst_14 [1] : vector<32x256xf32> to vector<32xf32>
    %69 = vector.shape_cast %68 : vector<32xf32> to vector<32x1xf32>
    %cst_15 = arith.constant 2.560000e+02 : f32
    %70 = vector.broadcast %cst_15 : f32 to vector<32x1xf32>
    %71 = arith.divf %69, %70 : vector<32x1xf32>
    %72 = vector.broadcast %71 : vector<32x1xf32> to vector<32x128xf32>
    %73 = arith.mulf %72, %3 : vector<32x128xf32>
    %cst_16 = arith.constant dense<0.000000e+00> : vector<128xf32>
    %74 = vector.multi_reduction <add>, %73, %cst_16 [0] : vector<32x128xf32> to vector<128xf32>
    %75 = vector.shape_cast %74 : vector<128xf32> to vector<1x128xf32>
    %76 = arith.addf %75, %4 : vector<1x128xf32>
    %cst_17 = arith.constant 0.000000e+00 : f32
    %77 = vector.broadcast %cst_17 : f32 to vector<6x128xf32>
    %78 = tpu.concatenate %40, %76, %77 in 0 : vector<1x128xf32>, vector<1x128xf32>, vector<6x128xf32> -> vector<8x128xf32>
    %c0_18 = arith.constant 0 : index
    %c0_19 = arith.constant 0 : index
    %79 = vector.load %arg2[%c0_18, %c0_19] : memref<8x128xf32, #tpu.memory_space<vmem>>, vector<8x128xf32>
    tpu.vector_store %arg2[%c0_18, %c0_19], %78 {strides = array<i32>} : memref<8x128xf32, #tpu.memory_space<vmem>>, vector<8x128xf32>,
    return
  }
}

</mosaic_0001>

<llo_original>
// kernel: classifier_model.1
$region0: #{classifier_model.1}
  #allocation0 [shape = 'u32[]', space=smem, size = 0x4, offset = 0x4, fixed_abs, tag = 'smem constant byte address 0x4 - core index']
  #allocation1 [shape = 'u32[144,128]{1,0:T(1,128)}', space=vmem, size = 0x12000, scoped, tag = 'internal scratch']
  %s0 = inlined_call_operand.vmem [shape: f32[8,256], index: 0, kind: input, shape index: {}]
  %s1 = inlined_call_operand.vmem [shape: f32[40,128], index: 1, kind: input, shape index: {}]
  %s2 = inlined_call_operand.vmem [shape: f32[8,128], index: 2, kind: output, shape index: {}]
  %s3 = sld [smem:[#allocation0]]
  $region18: #{classifier_model.1} parent=0
    _
  %s5 = ssub.s32 1, %s3
  %s6 = scalar_select 0, %s5, %s3
  // Predicated region
  $region2: #{classifier_model.1} parent=0 // pred_check
    _
  $region3: #{classifier_model.1} parent=0 // pred_check_branch
    %8 = sbr.rel (0) target = $region5
  $region4: #{classifier_model.1} parent=0 // pred_region
    _
  $region5: #{classifier_model.1} parent=0 // pred_fallthru
    _
  // Predicated region
  $region6: #{classifier_model.1} parent=0 // pred_check
    _
  $region7: #{classifier_model.1} parent=0 // pred_check_branch
    %10 = sbr.rel (0) target = $region9
  $region8: #{classifier_model.1} parent=0 // pred_region
    _
  $region9: #{classifier_model.1} parent=0 // pred_fallthru
    _
  %v11 = vld [vmem:[%s1] sm:$0xff]
  %v12 = vld [vmem:[%s1 + $0x8] sm:$0xff]
  %v13 = vld [vmem:[%s1 + $0x10] sm:$0xff]
  %v14 = vld [vmem:[%s1 + $0x18] sm:$0xff]
  %v15 = vld [vmem:[%s1 + $0x20] sm:$0xff]
  %v16 = vld [vmem:[%s0] ss:$8 sm:$0x3]
  %v18 = vlaneseq
  %v19 = vshrl.u32 %v18, 7
  %v20 = vsub.s32 0, %v19
  %v21 = vrot.slane %v16, %v20
  %v22 = vlaneseq
  %v23 = vshrl.u32 %v22, 7
  %v24 = vsub.s32 1, %v23
  %v25 = vrot.slane %v16, %v24
  %29 = vset.pattern.permute.xlu0 8
  %30 = vperm.xlu0 %29, %v11
  %v31 = vpop.permute.xlu0 %30
  %34 = vset.pattern.permute.xlu0 8
  %35 = vperm.xlu0 %34, %v12
  %v36 = vpop.permute.xlu0 %35
  %39 = vset.pattern.permute.xlu0 8
  %40 = vperm.xlu0 %39, %v13
  %v41 = vpop.permute.xlu0 %40
  %44 = vset.pattern.permute.xlu0 8
  %45 = vperm.xlu0 %44, %v14
  %v46 = vpop.permute.xlu0 %45
  %v48 = vmul.f32 %v21, %v31
  %v49 = vmul.f32 %v25, %v31
  %v50 = vmul.f32 %v21, %v36
  %v51 = vmul.f32 %v25, %v36
  %v52 = vmul.f32 %v21, %v41
  %v53 = vmul.f32 %v25, %v41
  %v54 = vmul.f32 %v21, %v46
  %v55 = vmul.f32 %v25, %v46
  %56 = vset.pattern.permute.xlu0 12
  %57 = vperm.xlu0 %56, %v11
  %v58 = vpop.permute.xlu0 %57
  %60 = vset.pattern.permute.xlu0 12
  %61 = vperm.xlu0 %60, %v12
  %v62 = vpop.permute.xlu0 %61
  %64 = vset.pattern.permute.xlu0 12
  %65 = vperm.xlu0 %64, %v13
  %v66 = vpop.permute.xlu0 %65
  %68 = vset.pattern.permute.xlu0 12
  %69 = vperm.xlu0 %68, %v14
  %v70 = vpop.permute.xlu0 %69
  %v72 = vadd.f32 %v58, %v48
  %v73 = vadd.f32 %v58, %v49
  %v74 = vadd.f32 %v62, %v50
  %v75 = vadd.f32 %v62, %v51
  %v76 = vadd.f32 %v66, %v52
  %v77 = vadd.f32 %v66, %v53
  %v78 = vadd.f32 %v70, %v54
  %v79 = vadd.f32 %v70, %v55
  %s80 = scalar_lea.vmem %s0, 1
  %v81 = vld [vmem:[%s80] ss:$8 sm:$0x3]
  %v83 = vlaneseq
  %v84 = vshrl.u32 %v83, 7
  %v85 = vsub.s32 0, %v84
  %v86 = vrot.slane %v81, %v85
  %v87 = vlaneseq
  %v88 = vshrl.u32 %v87, 7
  %v89 = vsub.s32 1, %v88
  %v90 = vrot.slane %v81, %v89
  %93 = vset.pattern.permute.xlu0 9
  %94 = vperm.xlu0 %93, %v11
  %v95 = vpop.permute.xlu0 %94
  %97 = vset.pattern.permute.xlu0 9
  %98 = vperm.xlu0 %97, %v12
  %v99 = vpop.permute.xlu0 %98
  %101 = vset.pattern.permute.xlu0 9
  %102 = vperm.xlu0 %101, %v13
  %v103 = vpop.permute.xlu0 %102
  %105 = vset.pattern.permute.xlu0 9
  %106 = vperm.xlu0 %105, %v14
  %v107 = vpop.permute.xlu0 %106
  %v109 = vmul.f32 %v86, %v95
  %v110 = vmul.f32 %v90, %v95
  %v111 = vmul.f32 %v86, %v99
  %v112 = vmul.f32 %v90, %v99
  %v113 = vmul.f32 %v86, %v103
  %v114 = vmul.f32 %v90, %v103
  %v115 = vmul.f32 %v86, %v107
  %v116 = vmul.f32 %v90, %v107
  %v117 = vadd.f32 %v72, %v109
  %v118 = vadd.f32 %v73, %v110
  %v119 = vadd.f32 %v74, %v111
  %v120 = vadd.f32 %v75, %v112
  %v121 = vadd.f32 %v76, %v113
  %v122 = vadd.f32 %v77, %v114
  %v123 = vadd.f32 %v78, %v115
  %v124 = vadd.f32 %v79, %v116
  %s125 = scalar_lea.vmem %s0, 2
  %v126 = vld [vmem:[%s125] ss:$8 sm:$0x3]
  %v128 = vlaneseq
  %v129 = vshrl.u32 %v128, 7
  %v130 = vsub.s32 0, %v129
  %v131 = vrot.slane %v126, %v130
  %v132 = vlaneseq
  %v133 = vshrl.u32 %v132, 7
  %v134 = vsub.s32 1, %v133
  %v135 = vrot.slane %v126, %v134
  %138 = vset.pattern.permute.xlu0 10
  %139 = vperm.xlu0 %138, %v11
  %v140 = vpop.permute.xlu0 %139
  %142 = vset.pattern.permute.xlu0 10
  %143 = vperm.xlu0 %142, %v12
  %v144 = vpop.permute.xlu0 %143
  %146 = vset.pattern.permute.xlu0 10
  %147 = vperm.xlu0 %146, %v13
  %v148 = vpop.permute.xlu0 %147
  %150 = vset.pattern.permute.xlu0 10
  %151 = vperm.xlu0 %150, %v14
  %v152 = vpop.permute.xlu0 %151
  %v154 = vmul.f32 %v131, %v140
  %v155 = vmul.f32 %v135, %v140
  %v156 = vmul.f32 %v131, %v144
  %v157 = vmul.f32 %v135, %v144
  %v158 = vmul.f32 %v131, %v148
  %v159 = vmul.f32 %v135, %v148
  %v160 = vmul.f32 %v131, %v152
  %v161 = vmul.f32 %v135, %v152
  %v162 = vadd.f32 %v117, %v154
  %v163 = vadd.f32 %v118, %v155
  %v164 = vadd.f32 %v119, %v156
  %v165 = vadd.f32 %v120, %v157
  %v166 = vadd.f32 %v121, %v158
  %v167 = vadd.f32 %v122, %v159
  %v168 = vadd.f32 %v123, %v160
  %v169 = vadd.f32 %v124, %v161
  %s170 = scalar_lea.vmem %s0, 3
  %v171 = vld [vmem:[%s170] ss:$8 sm:$0x3]
  %v173 = vlaneseq
  %v174 = vshrl.u32 %v173, 7
  %v175 = vsub.s32 0, %v174
  %v176 = vrot.slane %v171, %v175
  %v177 = vlaneseq
  %v178 = vshrl.u32 %v177, 7
  %v179 = vsub.s32 1, %v178
  %v180 = vrot.slane %v171, %v179
  %183 = vset.pattern.permute.xlu0 11
  %184 = vperm.xlu0 %183, %v11
  %v185 = vpop.permute.xlu0 %184
  %187 = vset.pattern.permute.xlu0 11
  %188 = vperm.xlu0 %187, %v12
  %v189 = vpop.permute.xlu0 %188
  %191 = vset.pattern.permute.xlu0 11
  %192 = vperm.xlu0 %191, %v13
  %v193 = vpop.permute.xlu0 %192
  %195 = vset.pattern.permute.xlu0 11
  %196 = vperm.xlu0 %195, %v14
  %v197 = vpop.permute.xlu0 %196
  %v199 = vmul.f32 %v176, %v185
  %v200 = vmul.f32 %v180, %v185
  %v201 = vmul.f32 %v176, %v189
  %v202 = vmul.f32 %v180, %v189
  %v203 = vmul.f32 %v176, %v193
  %v204 = vmul.f32 %v180, %v193
  %v205 = vmul.f32 %v176, %v197
  %v206 = vmul.f32 %v180, %v197
  %v207 = vadd.f32 %v162, %v199
  %v208 = vadd.f32 %v163, %v200
  %v209 = vadd.f32 %v164, %v201
  %v210 = vadd.f32 %v165, %v202
  %v211 = vadd.f32 %v166, %v203
  %v212 = vadd.f32 %v167, %v204
  %v213 = vadd.f32 %v168, %v205
  %v214 = vadd.f32 %v169, %v206
  %v215 = vmax.f32 %v207, 0.0
  %v216 = vmax.f32 %v208, 0.0
  %v217 = vmax.f32 %v209, 0.0
  %v218 = vmax.f32 %v210, 0.0
  %v219 = vmax.f32 %v211, 0.0
  %v220 = vmax.f32 %v212, 0.0
  %v221 = vmax.f32 %v213, 0.0
  %v222 = vmax.f32 %v214, 0.0
  %v223 = vadd.f32 %v215, %v216
  %224 = vadd.xlane.f32.xlu0 %v223
  %v225 = vpop.xlane.xlu0 %224
  %v226 = vadd.f32 %v217, %v218
  %227 = vadd.xlane.f32.xlu0 %v226
  %v228 = vpop.xlane.xlu0 %227
  %v229 = vadd.f32 %v219, %v220
  %230 = vadd.xlane.f32.xlu0 %v229
  %v231 = vpop.xlane.xlu0 %230
  %v232 = vadd.f32 %v221, %v222
  %233 = vadd.xlane.f32.xlu0 %v232
  %v234 = vpop.xlane.xlu0 %233
  %v235 = vrcp.pop 256.0
  %v236 = vmul.f32 %v225, %v235
  %v237 = vmul.f32 %v228, %v235
  %v238 = vmul.f32 %v231, %v235
  %v239 = vmul.f32 %v234, %v235
  %v240 = vmul.f32 %v236, %v11
  %v241 = vmul.f32 %v237, %v12
  %v242 = vmul.f32 %v238, %v13
  %v243 = vmul.f32 %v239, %v14
  %v244 = vadd.f32 %v240, %v241
  %v245 = vadd.f32 %v244, %v242
  %v246 = vadd.f32 %v245, %v243
  %v247 = vrot.slane %v246, 4
  %v248 = vadd.f32 %v246, %v247
  %v249 = vrot.slane %v248, 2
  %v250 = vadd.f32 %v248, %v249
  %v251 = vrot.slane %v250, 1
  %v252 = vadd.f32 %v250, %v251
  %v253 = vadd.f32 %v252, %v15
  %s254 = scalar_lea.vmem %s0, 4
  %v255 = vld [vmem:[%s254] ss:$8 sm:$0x3]
  %v257 = vlaneseq
  %v258 = vshrl.u32 %v257, 7
  %v259 = vsub.s32 0, %v258
  %v260 = vrot.slane %v255, %v259
  %v261 = vlaneseq
  %v262 = vshrl.u32 %v261, 7
  %v263 = vsub.s32 1, %v262
  %v264 = vrot.slane %v255, %v263
  %v267 = vmul.f32 %v260, %v31
  %v268 = vmul.f32 %v264, %v31
  %v269 = vmul.f32 %v260, %v36
  %v270 = vmul.f32 %v264, %v36
  %v271 = vmul.f32 %v260, %v41
  %v272 = vmul.f32 %v264, %v41
  %v273 = vmul.f32 %v260, %v46
  %v274 = vmul.f32 %v264, %v46
  %v275 = vadd.f32 %v58, %v267
  %v276 = vadd.f32 %v58, %v268
  %v277 = vadd.f32 %v62, %v269
  %v278 = vadd.f32 %v62, %v270
  %v279 = vadd.f32 %v66, %v271
  %v280 = vadd.f32 %v66, %v272
  %v281 = vadd.f32 %v70, %v273
  %v282 = vadd.f32 %v70, %v274
  %s283 = scalar_lea.vmem %s0, 5
  %v284 = vld [vmem:[%s283] ss:$8 sm:$0x3]
  %v286 = vlaneseq
  %v287 = vshrl.u32 %v286, 7
  %v288 = vsub.s32 0, %v287
  %v289 = vrot.slane %v284, %v288
  %v290 = vlaneseq
  %v291 = vshrl.u32 %v290, 7
  %v292 = vsub.s32 1, %v291
  %v293 = vrot.slane %v284, %v292
  %v296 = vmul.f32 %v289, %v95
  %v297 = vmul.f32 %v293, %v95
  %v298 = vmul.f32 %v289, %v99
  %v299 = vmul.f32 %v293, %v99
  %v300 = vmul.f32 %v289, %v103
  %v301 = vmul.f32 %v293, %v103
  %v302 = vmul.f32 %v289, %v107
  %v303 = vmul.f32 %v293, %v107
  %v304 = vadd.f32 %v275, %v296
  %v305 = vadd.f32 %v276, %v297
  %v306 = vadd.f32 %v277, %v298
  %v307 = vadd.f32 %v278, %v299
  %v308 = vadd.f32 %v279, %v300
  %v309 = vadd.f32 %v280, %v301
  %v310 = vadd.f32 %v281, %v302
  %v311 = vadd.f32 %v282, %v303
  %s312 = scalar_lea.vmem %s0, 6
  %v313 = vld [vmem:[%s312] ss:$8 sm:$0x3]
  %v315 = vlaneseq
  %v316 = vshrl.u32 %v315, 7
  %v317 = vsub.s32 0, %v316
  %v318 = vrot.slane %v313, %v317
  %v319 = vlaneseq
  %v320 = vshrl.u32 %v319, 7
  %v321 = vsub.s32 1, %v320
  %v322 = vrot.slane %v313, %v321
  %v325 = vmul.f32 %v318, %v140
  %v326 = vmul.f32 %v322, %v140
  %v327 = vmul.f32 %v318, %v144
  %v328 = vmul.f32 %v322, %v144
  %v329 = vmul.f32 %v318, %v148
  %v330 = vmul.f32 %v322, %v148
  %v331 = vmul.f32 %v318, %v152
  %v332 = vmul.f32 %v322, %v152
  %v333 = vadd.f32 %v304, %v325
  %v334 = vadd.f32 %v305, %v326
  %v335 = vadd.f32 %v306, %v327
  %v336 = vadd.f32 %v307, %v328
  %v337 = vadd.f32 %v308, %v329
  %v338 = vadd.f32 %v309, %v330
  %v339 = vadd.f32 %v310, %v331
  %v340 = vadd.f32 %v311, %v332
  %s341 = scalar_lea.vmem %s0, 7
  %v342 = vld [vmem:[%s341] ss:$8 sm:$0x3]
  %v344 = vlaneseq
  %v345 = vshrl.u32 %v344, 7
  %v346 = vsub.s32 0, %v345
  %v347 = vrot.slane %v342, %v346
  %v348 = vlaneseq
  %v349 = vshrl.u32 %v348, 7
  %v350 = vsub.s32 1, %v349
  %v351 = vrot.slane %v342, %v350
  %v354 = vmul.f32 %v347, %v185
  %v355 = vmul.f32 %v351, %v185
  %v356 = vmul.f32 %v347, %v189
  %v357 = vmul.f32 %v351, %v189
  %v358 = vmul.f32 %v347, %v193
  %v359 = vmul.f32 %v351, %v193
  %v360 = vmul.f32 %v347, %v197
  %v361 = vmul.f32 %v351, %v197
  %v362 = vadd.f32 %v333, %v354
  %v363 = vadd.f32 %v334, %v355
  %v364 = vadd.f32 %v335, %v356
  %v365 = vadd.f32 %v336, %v357
  %v366 = vadd.f32 %v337, %v358
  %v367 = vadd.f32 %v338, %v359
  %v368 = vadd.f32 %v339, %v360
  %v369 = vadd.f32 %v340, %v361
  %v370 = vmax.f32 %v362, 0.0
  %v371 = vmax.f32 %v363, 0.0
  %v372 = vmax.f32 %v364, 0.0
  %v373 = vmax.f32 %v365, 0.0
  %v374 = vmax.f32 %v366, 0.0
  %v375 = vmax.f32 %v367, 0.0
  %v376 = vmax.f32 %v368, 0.0
  %v377 = vmax.f32 %v369, 0.0
  %v378 = vadd.f32 %v370, %v371
  %379 = vadd.xlane.f32.xlu0 %v378
  %v380 = vpop.xlane.xlu0 %379
  %v381 = vadd.f32 %v372, %v373
  %382 = vadd.xlane.f32.xlu0 %v381
  %v383 = vpop.xlane.xlu0 %382
  %v384 = vadd.f32 %v374, %v375
  %385 = vadd.xlane.f32.xlu0 %v384
  %v386 = vpop.xlane.xlu0 %385
  %v387 = vadd.f32 %v376, %v377
  %388 = vadd.xlane.f32.xlu0 %v387
  %v389 = vpop.xlane.xlu0 %388
  %v390 = vmul.f32 %v380, %v235
  %v391 = vmul.f32 %v383, %v235
  %v392 = vmul.f32 %v386, %v235
  %v393 = vmul.f32 %v389, %v235
  %v394 = vmul.f32 %v390, %v11
  %v395 = vmul.f32 %v391, %v12
  %v396 = vmul.f32 %v392, %v13
  %v397 = vmul.f32 %v393, %v14
  %v398 = vadd.f32 %v394, %v395
  %v399 = vadd.f32 %v398, %v396
  %v400 = vadd.f32 %v399, %v397
  %v401 = vrot.slane %v400, 4
  %v402 = vadd.f32 %v400, %v401
  %v403 = vrot.slane %v402, 2
  %v404 = vadd.f32 %v402, %v403
  %v405 = vrot.slane %v404, 1
  %v406 = vadd.f32 %v404, %v405
  %v407 = vadd.f32 %v406, %v15
  %v409 = vrot.slane %v407, 7
  %vm411 = vcmask 1040384
  %v412 = vsel %vm411, %v253, %v409
  %vm413 = vcmask 1041408
  %v414 = vsel %vm413, %v412, 0.0
  %415 = vst [vmem:[%s2] sm:$0xff] %v414
  // Predicated region
  $region10: #{classifier_model.1} parent=0 // pred_check
    _
  $region11: #{classifier_model.1} parent=0 // pred_check_branch
    %417 = sbr.rel (0) target = $region13
  $region12: #{classifier_model.1} parent=0 // pred_region
    _
  $region13: #{classifier_model.1} parent=0 // pred_fallthru
    _
  // Predicated region
  $region14: #{classifier_model.1} parent=0 // pred_check
    _
  $region15: #{classifier_model.1} parent=0 // pred_check_branch
    %419 = sbr.rel (0) target = $region17
  $region16: #{classifier_model.1} parent=0 // pred_region
    _
  $region17: #{classifier_model.1} parent=0 // pred_fallthru
    _

</llo_original>
